<compile_context>
chip_gen: v6e
topology: v6e:2x2x1
jax: 0.10.0
libtpu: 0.0.40
codegen_flags: <defaults>
</compile_context>

<pallas_src>
import jax
import jax.numpy as jnp
from jax.experimental import pallas as pl
from jax.experimental.pallas import tpu as pltpu

# ---- module hyperparameters (synthetic, deterministic) ----
DIM = 32
MLP_EXPANSION = 2
DIM_HIDDEN = DIM * MLP_EXPANSION              # 64
DEPTH = 2                                     # Linear -> Tanh -> Linear
DIM_INPUTS = (16, 24, 40, 48)                 # per-band freq counts; sum = 128
NUM_BANDS = len(DIM_INPUTS)
F_TOTAL = sum(DIM_INPUTS)                     # 128 (lane-dense output)
D_IN_ALL = NUM_BANDS * DIM                    # 128
D_HID_ALL = NUM_BANDS * DIM_HIDDEN            # 256

DEFAULT_BLOCK_ROWS = 512                      # rows per grid step (multiple of 8)


def _round_up(n: int, m: int) -> int:
    return (n + m - 1) // m * m


def mask_estimator_kernel(x_ref, w1_ref, b1_ref, w2_ref, b2_ref, o_ref):
    # x_ref : (TR, NB*DIM)               flattened (batch*time) rows
    # w1_ref: (NB*DIM, NB*DIM_HIDDEN)    block-diagonal fused first linear
    # b1_ref: (1, NB*DIM_HIDDEN)
    # w2_ref: (NB*DIM_HIDDEN, 2*F_TOTAL) block-diagonal, columns [a... | g...]
    # b2_ref: (1, 2*F_TOTAL)
    # o_ref : (TR, F_TOTAL)
    x = x_ref[...]

    # All bands' first linear + tanh in one lane-dense matmul (f32 accumulate).
    h = jnp.tanh(
        jnp.dot(x, w1_ref[...], preferred_element_type=jnp.float32) + b1_ref[...]
    )                                                            # (TR, NB*DIM_HIDDEN)

    # All bands' second linear; columns already ordered [a | g].
    y = jnp.dot(h, w2_ref[...], preferred_element_type=jnp.float32) + b2_ref[...]

    a = y[:, :F_TOTAL]                                           # lane-aligned split
    g = y[:, F_TOTAL:]
    # sigmoid(g) = 0.5 + 0.5*tanh(0.5*g): tanh runs on the EUP slot (free vs the
    # VALU Newton-Raphson divide), exact to f32 rounding, no exp overflow.
    sig = 0.5 + 0.5 * jnp.tanh(0.5 * g)
    o_ref[...] = (a * sig).astype(o_ref.dtype)


def fuse_params(w1_list, b1_list, w2_list, b2_list):
    """Host-side (one-time) fusion of per-band MLP weights into block-diagonal
    lane-dense matrices, with GLU halves rearranged to [all a | all g]."""
    w1_bd = jnp.zeros((D_IN_ALL, D_HID_ALL), jnp.float32)
    b1_cat = jnp.concatenate([b.astype(jnp.float32) for b in b1_list])
    w2_bd = jnp.zeros((D_HID_ALL, 2 * F_TOTAL), jnp.float32)
    b2_re = jnp.zeros((2 * F_TOTAL,), jnp.float32)
    off = 0
    for i, f in enumerate(DIM_INPUTS):
        w1_bd = w1_bd.at[i * DIM:(i + 1) * DIM,
                         i * DIM_HIDDEN:(i + 1) * DIM_HIDDEN].set(w1_list[i])
        rows = slice(i * DIM_HIDDEN, (i + 1) * DIM_HIDDEN)
        w2_bd = w2_bd.at[rows, off:off + f].set(w2_list[i][:, :f])                      # "a"
        w2_bd = w2_bd.at[rows, F_TOTAL + off:F_TOTAL + off + f].set(w2_list[i][:, f:])  # "g"
        b2_re = b2_re.at[off:off + f].set(b2_list[i][:f])
        b2_re = b2_re.at[F_TOTAL + off:F_TOTAL + off + f].set(b2_list[i][f:])
        off += f
    return w1_bd, b1_cat[None, :], w2_bd, b2_re[None, :]


def _make_call(tr, n_steps, out_dtype, in_itemsize, single_buffer_weights):
    """Builds the pallas_call for a given row tile / step count."""
    w_kwargs = {"pipeline_mode": pl.Buffered(1)} if single_buffer_weights else {}
    weight_bufs = 1 if single_buffer_weights else 2

    # VMEM footprint: double-buffered x/out tiles + f32 intermediates (h, y)
    # + weights. 2x headroom, capped at the v6e/v7x scoped default (32 MiB).
    tile_bytes = 2 * tr * (D_IN_ALL + F_TOTAL) * in_itemsize
    interm_bytes = tr * (D_HID_ALL + 2 * F_TOTAL) * 4
    weight_bytes = weight_bufs * 4 * (D_IN_ALL * D_HID_ALL + D_HID_ALL
                                      + D_HID_ALL * 2 * F_TOTAL + 2 * F_TOTAL)
    vmem_limit = int(min(32 * 2**20,
                         max(4 * 2**20, 2 * (tile_bytes + interm_bytes + weight_bytes))))

    r_pad = n_steps * tr
    cost = pl.CostEstimate(
        flops=2 * r_pad * (D_IN_ALL * D_HID_ALL + D_HID_ALL * 2 * F_TOTAL),
        transcendentals=r_pad * (D_HID_ALL + F_TOTAL),
        bytes_accessed=r_pad * (D_IN_ALL + F_TOTAL) * in_itemsize + weight_bytes,
    )

    return pl.pallas_call(
        mask_estimator_kernel,
        out_shape=jax.ShapeDtypeStruct((r_pad, F_TOTAL), out_dtype),
        grid_spec=pltpu.PrefetchScalarGridSpec(
            num_scalar_prefetch=0,
            grid=(n_steps,),
            in_specs=[
                pl.BlockSpec((tr, D_IN_ALL), lambda r: (r, 0)),
                pl.BlockSpec((D_IN_ALL, D_HID_ALL), lambda r: (0, 0), **w_kwargs),
                pl.BlockSpec((1, D_HID_ALL), lambda r: (0, 0), **w_kwargs),
                pl.BlockSpec((D_HID_ALL, 2 * F_TOTAL), lambda r: (0, 0), **w_kwargs),
                pl.BlockSpec((1, 2 * F_TOTAL), lambda r: (0, 0), **w_kwargs),
            ],
            out_specs=pl.BlockSpec((tr, F_TOTAL), lambda r: (r, 0)),
        ),
        compiler_params=pltpu.CompilerParams(
            dimension_semantics=("parallel",),
            vmem_limit_bytes=vmem_limit,
        ),
        cost_estimate=cost,
    )


def mask_estimator(x, w1_bd, b1, w2_bd, b2, *, block_rows=DEFAULT_BLOCK_ROWS):
    B, T, NB, D = x.shape
    assert NB == NUM_BANDS and D == DIM
    R = B * T
    # (B,T,NB,DIM) -> (B*T, NB*DIM): bands contiguous on lanes, matching W1_bd rows.
    xf = x.reshape(R, NB * D)

    # Fixed row tile (multiple of 8), never larger than needed. At realistic
    # B*T this yields many "parallel" grid steps (both v7x TCs busy, pipelined
    # DMA) while keeping per-step VMEM at ~2-3 MiB on every generation.
    tr = min(_round_up(block_rows, 8), _round_up(R, 8))
    r_pad = _round_up(R, tr)
    if r_pad != R:
        xf = jnp.pad(xf, ((0, r_pad - R), (0, 0)))   # tail rows: pad, slice off below
    n_steps = r_pad // tr

    args = (xf, w1_bd, b1, w2_bd, b2)
    try:
        out = _make_call(tr, n_steps, x.dtype, xf.dtype.itemsize, True)(*args)
    except Exception:
        # pipeline_mode=pl.Buffered(1) unsupported on this jax build: fall back
        # to default double-buffered weights (small VMEM-headroom loss only).
        out = _make_call(tr, n_steps, x.dtype, xf.dtype.itemsize, False)(*args)

    return out[:R].reshape(B, T, F_TOTAL)


def reference(x, w1_list, b1_list, w2_list, b2_list):
    """Pure-JAX mirror of the PyTorch forward (per-band MLP + GLU, concat)."""
    outs = []
    for i, f in enumerate(DIM_INPUTS):
        band = x[..., i, :]                                       # unbind(dim=-2)
        h = jnp.tanh(band @ w1_list[i] + b1_list[i])
        y = h @ w2_list[i] + b2_list[i]
        a, g = y[..., :f], y[..., f:]
        outs.append(a * jax.nn.sigmoid(g))                        # GLU(dim=-1)
    return jnp.concatenate(outs, axis=-1)


if __name__ == "__main__":
    key = jax.random.PRNGKey(0)
    B, T = 2, 8
    keys = jax.random.split(key, 1 + 4 * NUM_BANDS)
    x = jax.random.normal(keys[0], (B, T, NUM_BANDS, DIM), jnp.float32)

    # Deterministic synthetic per-band MLP parameters (right-multiply layout).
    w1_list, b1_list, w2_list, b2_list = [], [], [], []
    kidx = 1
    for f in DIM_INPUTS:
        w1_list.append(jax.random.normal(keys[kidx], (DIM, DIM_HIDDEN), jnp.float32) * DIM ** -0.5); kidx += 1
        b1_list.append(jax.random.normal(keys[kidx], (DIM_HIDDEN,), jnp.float32) * 0.1); kidx += 1
        w2_list.append(jax.random.normal(keys[kidx], (DIM_HIDDEN, 2 * f), jnp.float32) * DIM_HIDDEN ** -0.5); kidx += 1
        b2_list.append(jax.random.normal(keys[kidx], (2 * f,), jnp.float32) * 0.1); kidx += 1

    w1_bd, b1, w2_bd, b2 = fuse_params(w1_list, b1_list, w2_list, b2_list)

    out = mask_estimator(x, w1_bd, b1, w2_bd, b2)
    out = jax.block_until_ready(out)

    ref = reference(x, w1_list, b1_list, w2_list, b2_list)
    assert out.shape == (B, T, F_TOTAL)
    err = float(jnp.max(jnp.abs(out - ref)))
    assert jnp.allclose(out, ref, atol=1e-4, rtol=1e-4), err

    print("KERNEL_OK")
</pallas_src>

<mosaic_0001>
module attributes {stable_mosaic.version = 11 : i64} {
  func.func @mask_estimator_kernel(%arg0: i32, %arg1: memref<16x128xf32, #tpu.memory_space<vmem>>, %arg2: memref<128x256xf32, #tpu.memory_space<vmem>>, %arg3: memref<1x256xf32, #tpu.memory_space<vmem>>, %arg4: memref<256x256xf32, #tpu.memory_space<vmem>>, %arg5: memref<1x256xf32, #tpu.memory_space<vmem>>, %arg6: memref<16x128xf32, #tpu.memory_space<vmem>>) attributes {dimension_semantics = [#tpu.dimension_semantics<parallel>], iteration_bounds = array<i64: 1>, scalar_prefetch = 0 : i64, scratch_operands = 0 : i64, tpu.core_type = #tpu.core_type<tc>, window_params = [{transform_indices = @transform_0, window_bounds = array<i64: 16, 128>}, {pipeline_mode = #tpu.pipeline_mode<synchronous>, transform_indices = @transform_1, window_bounds = array<i64: 128, 256>}, {pipeline_mode = #tpu.pipeline_mode<synchronous>, transform_indices = @transform_2, window_bounds = array<i64: 1, 256>}, {pipeline_mode = #tpu.pipeline_mode<synchronous>, transform_indices = @transform_3, window_bounds = array<i64: 256, 256>}, {pipeline_mode = #tpu.pipeline_mode<synchronous>, transform_indices = @transform_4, window_bounds = array<i64: 1, 256>}, {transform_indices = @transform_5, window_bounds = array<i64: 16, 128>}]} {
    %c0 = arith.constant 0 : index
    %c0_0 = arith.constant 0 : index
    %0 = vector.load %arg1[%c0, %c0_0] : memref<16x128xf32, #tpu.memory_space<vmem>>, vector<16x128xf32>
    %c0_1 = arith.constant 0 : index
    %c0_2 = arith.constant 0 : index
    %1 = vector.load %arg2[%c0_1, %c0_2] : memref<128x256xf32, #tpu.memory_space<vmem>>, vector<128x256xf32>
    %cst = arith.constant dense<0.000000e+00> : vector<16x256xf32>
    %2 = tpu.matmul %0, %1, %cst {dimension_numbers = #tpu.dot_dimension_numbers<[1], [0], [0], [1], [0, 0, 1, 1], [], []>} : vector<16x128xf32>, vector<128x256xf32>, vector<16x256xf32> -> vector<16x256xf32>
    %c0_3 = arith.constant 0 : index
    %c0_4 = arith.constant 0 : index
    %3 = vector.load %arg3[%c0_3, %c0_4] : memref<1x256xf32, #tpu.memory_space<vmem>>, vector<1x256xf32>
    %4 = vector.broadcast %3 : vector<1x256xf32> to vector<16x256xf32>
    %5 = arith.addf %2, %4 : vector<16x256xf32>
    %6 = math.tanh %5 : vector<16x256xf32>
    %c0_5 = arith.constant 0 : index
    %c0_6 = arith.constant 0 : index
    %7 = vector.load %arg4[%c0_5, %c0_6] : memref<256x256xf32, #tpu.memory_space<vmem>>, vector<256x256xf32>
    %cst_7 = arith.constant dense<0.000000e+00> : vector<16x256xf32>
    %8 = tpu.matmul %6, %7, %cst_7 {dimension_numbers = #tpu.dot_dimension_numbers<[1], [0], [0], [1], [0, 0, 1, 1], [], []>} : vector<16x256xf32>, vector<256x256xf32>, vector<16x256xf32> -> vector<16x256xf32>
    %c0_8 = arith.constant 0 : index
    %c0_9 = arith.constant 0 : index
    %9 = vector.load %arg5[%c0_8, %c0_9] : memref<1x256xf32, #tpu.memory_space<vmem>>, vector<1x256xf32>
    %10 = vector.broadcast %9 : vector<1x256xf32> to vector<16x256xf32>
    %11 = arith.addf %8, %10 : vector<16x256xf32>
    %12 = vector.extract_strided_slice %11 {offsets = [0, 0], sizes = [16, 128], strides = [1, 1]} : vector<16x256xf32> to vector<16x128xf32>
    %13 = vector.extract_strided_slice %11 {offsets = [0, 128], sizes = [16, 128], strides = [1, 1]} : vector<16x256xf32> to vector<16x128xf32>
    %cst_10 = arith.constant 5.000000e-01 : f32
    %14 = vector.broadcast %cst_10 : f32 to vector<16x128xf32>
    %15 = arith.mulf %14, %13 : vector<16x128xf32>
    %16 = math.tanh %15 : vector<16x128xf32>
    %cst_11 = arith.constant 5.000000e-01 : f32
    %17 = vector.broadcast %cst_11 : f32 to vector<16x128xf32>
    %18 = arith.mulf %17, %16 : vector<16x128xf32>
    %cst_12 = arith.constant 5.000000e-01 : f32
    %19 = vector.broadcast %cst_12 : f32 to vector<16x128xf32>
    %20 = arith.addf %19, %18 : vector<16x128xf32>
    %21 = arith.mulf %12, %20 : vector<16x128xf32>
    %c0_13 = arith.constant 0 : index
    %c0_14 = arith.constant 0 : index
    %22 = vector.load %arg6[%c0_13, %c0_14] : memref<16x128xf32, #tpu.memory_space<vmem>>, vector<16x128xf32>
    tpu.vector_store %arg6[%c0_13, %c0_14], %21 {strides = array<i32>} : memref<16x128xf32, #tpu.memory_space<vmem>>, vector<16x128xf32>,
    return
  }
  func.func @transform_0(%arg0: i32) -> (i32, i32) {
    %c0_i32 = arith.constant 0 : i32
    %c0_i32_0 = arith.constant 0 : i32
    return %arg0, %c0_i32 : i32, i32
  }
  func.func @transform_1(%arg0: i32) -> (i32, i32) {
    %c0_i32 = arith.constant 0 : i32
    %c0_i32_0 = arith.constant 0 : i32
    %c0_i32_1 = arith.constant 0 : i32
    return %c0_i32, %c0_i32_0 : i32, i32
  }
  func.func @transform_2(%arg0: i32) -> (i32, i32) {
    %c0_i32 = arith.constant 0 : i32
    %c0_i32_0 = arith.constant 0 : i32
    %c0_i32_1 = arith.constant 0 : i32
    return %c0_i32, %c0_i32_0 : i32, i32
  }
  func.func @transform_3(%arg0: i32) -> (i32, i32) {
    %c0_i32 = arith.constant 0 : i32
    %c0_i32_0 = arith.constant 0 : i32
    %c0_i32_1 = arith.constant 0 : i32
    return %c0_i32, %c0_i32_0 : i32, i32
  }
  func.func @transform_4(%arg0: i32) -> (i32, i32) {
    %c0_i32 = arith.constant 0 : i32
    %c0_i32_0 = arith.constant 0 : i32
    %c0_i32_1 = arith.constant 0 : i32
    return %c0_i32, %c0_i32_0 : i32, i32
  }
  func.func @transform_5(%arg0: i32) -> (i32, i32) {
    %c0_i32 = arith.constant 0 : i32
    %c0_i32_0 = arith.constant 0 : i32
    return %arg0, %c0_i32 : i32, i32
  }
}

module attributes {stable_mosaic.version = 11 : i64} {
  func.func @mask_estimator_kernel(%arg0: i32, %arg1: memref<16x128xf32, #tpu.memory_space<vmem>>, %arg2: memref<128x256xf32, #tpu.memory_space<vmem>>, %arg3: memref<1x256xf32, #tpu.memory_space<vmem>>, %arg4: memref<256x256xf32, #tpu.memory_space<vmem>>, %arg5: memref<1x256xf32, #tpu.memory_space<vmem>>, %arg6: memref<16x128xf32, #tpu.memory_space<vmem>>) attributes {dimension_semantics = [#tpu.dimension_semantics<parallel>], iteration_bounds = array<i64: 1>, scalar_prefetch = 0 : i64, scratch_operands = 0 : i64, tpu.core_type = #tpu.core_type<tc>, window_params = [{transform_indices = @transform_0, window_bounds = array<i64: 16, 128>}, {pipeline_mode = #tpu.pipeline_mode<synchronous>, transform_indices = @transform_1, window_bounds = array<i64: 128, 256>}, {pipeline_mode = #tpu.pipeline_mode<synchronous>, transform_indices = @transform_2, window_bounds = array<i64: 1, 256>}, {pipeline_mode = #tpu.pipeline_mode<synchronous>, transform_indices = @transform_3, window_bounds = array<i64: 256, 256>}, {pipeline_mode = #tpu.pipeline_mode<synchronous>, transform_indices = @transform_4, window_bounds = array<i64: 1, 256>}, {transform_indices = @transform_5, window_bounds = array<i64: 16, 128>}]} {
    %c0 = arith.constant 0 : index
    %c0_0 = arith.constant 0 : index
    %0 = vector.load %arg1[%c0, %c0_0] : memref<16x128xf32, #tpu.memory_space<vmem>>, vector<16x128xf32>
    %c0_1 = arith.constant 0 : index
    %c0_2 = arith.constant 0 : index
    %1 = vector.load %arg2[%c0_1, %c0_2] : memref<128x256xf32, #tpu.memory_space<vmem>>, vector<128x256xf32>
    %cst = arith.constant dense<0.000000e+00> : vector<16x256xf32>
    %2 = tpu.matmul %0, %1, %cst {dimension_numbers = #tpu.dot_dimension_numbers<[1], [0], [0], [1], [0, 0, 1, 1], [], []>} : vector<16x128xf32>, vector<128x256xf32>, vector<16x256xf32> -> vector<16x256xf32>
    %c0_3 = arith.constant 0 : index
    %c0_4 = arith.constant 0 : index
    %3 = vector.load %arg3[%c0_3, %c0_4] : memref<1x256xf32, #tpu.memory_space<vmem>>, vector<1x256xf32>
    %4 = vector.broadcast %3 : vector<1x256xf32> to vector<16x256xf32>
    %5 = arith.addf %2, %4 : vector<16x256xf32>
    %6 = math.tanh %5 : vector<16x256xf32>
    %c0_5 = arith.constant 0 : index
    %c0_6 = arith.constant 0 : index
    %7 = vector.load %arg4[%c0_5, %c0_6] : memref<256x256xf32, #tpu.memory_space<vmem>>, vector<256x256xf32>
    %cst_7 = arith.constant dense<0.000000e+00> : vector<16x256xf32>
    %8 = tpu.matmul %6, %7, %cst_7 {dimension_numbers = #tpu.dot_dimension_numbers<[1], [0], [0], [1], [0, 0, 1, 1], [], []>} : vector<16x256xf32>, vector<256x256xf32>, vector<16x256xf32> -> vector<16x256xf32>
    %c0_8 = arith.constant 0 : index
    %c0_9 = arith.constant 0 : index
    %9 = vector.load %arg5[%c0_8, %c0_9] : memref<1x256xf32, #tpu.memory_space<vmem>>, vector<1x256xf32>
    %10 = vector.broadcast %9 : vector<1x256xf32> to vector<16x256xf32>
    %11 = arith.addf %8, %10 : vector<16x256xf32>
    %12 = vector.extract_strided_slice %11 {offsets = [0, 0], sizes = [16, 128], strides = [1, 1]} : vector<16x256xf32> to vector<16x128xf32>
    %13 = vector.extract_strided_slice %11 {offsets = [0, 128], sizes = [16, 128], strides = [1, 1]} : vector<16x256xf32> to vector<16x128xf32>
    %cst_10 = arith.constant 5.000000e-01 : f32
    %14 = vector.broadcast %cst_10 : f32 to vector<16x128xf32>
    %15 = arith.mulf %14, %13 : vector<16x128xf32>
    %16 = math.tanh %15 : vector<16x128xf32>
    %cst_11 = arith.constant 5.000000e-01 : f32
    %17 = vector.broadcast %cst_11 : f32 to vector<16x128xf32>
    %18 = arith.mulf %17, %16 : vector<16x128xf32>
    %cst_12 = arith.constant 5.000000e-01 : f32
    %19 = vector.broadcast %cst_12 : f32 to vector<16x128xf32>
    %20 = arith.addf %19, %18 : vector<16x128xf32>
    %21 = arith.mulf %12, %20 : vector<16x128xf32>
    %c0_13 = arith.constant 0 : index
    %c0_14 = arith.constant 0 : index
    %22 = vector.load %arg6[%c0_13, %c0_14] : memref<16x128xf32, #tpu.memory_space<vmem>>, vector<16x128xf32>
    tpu.vector_store %arg6[%c0_13, %c0_14], %21 {strides = array<i32>} : memref<16x128xf32, #tpu.memory_space<vmem>>, vector<16x128xf32>,
    return
  }
  func.func @transform_0(%arg0: i32) -> (i32, i32) {
    %c0_i32 = arith.constant 0 : i32
    %c0_i32_0 = arith.constant 0 : i32
    return %arg0, %c0_i32 : i32, i32
  }
  func.func @transform_1(%arg0: i32) -> (i32, i32) {
    %c0_i32 = arith.constant 0 : i32
    %c0_i32_0 = arith.constant 0 : i32
    %c0_i32_1 = arith.constant 0 : i32
    return %c0_i32, %c0_i32_0 : i32, i32
  }
  func.func @transform_2(%arg0: i32) -> (i32, i32) {
    %c0_i32 = arith.constant 0 : i32
    %c0_i32_0 = arith.constant 0 : i32
    %c0_i32_1 = arith.constant 0 : i32
    return %c0_i32, %c0_i32_0 : i32, i32
  }
  func.func @transform_3(%arg0: i32) -> (i32, i32) {
    %c0_i32 = arith.constant 0 : i32
    %c0_i32_0 = arith.constant 0 : i32
    %c0_i32_1 = arith.constant 0 : i32
    return %c0_i32, %c0_i32_0 : i32, i32
  }
  func.func @transform_4(%arg0: i32) -> (i32, i32) {
    %c0_i32 = arith.constant 0 : i32
    %c0_i32_0 = arith.constant 0 : i32
    %c0_i32_1 = arith.constant 0 : i32
    return %c0_i32, %c0_i32_0 : i32, i32
  }
  func.func @transform_5(%arg0: i32) -> (i32, i32) {
    %c0_i32 = arith.constant 0 : i32
    %c0_i32_0 = arith.constant 0 : i32
    return %arg0, %c0_i32 : i32, i32
  }
}

</mosaic_0001>

<llo_original>
// kernel: tpu_custom_call.1
$region0: #{tpu_custom_call.1}
  #allocation0 [shape = 'u32[]', space=smem, size = 0x4, offset = 0x4, fixed_abs, tag = 'smem constant byte address 0x4 - core index']
  #allocation1 [shape = 'u32[144,128]{1,0:T(1,128)}', space=vmem, size = 0x12000, scoped, tag = 'internal scratch']
  %s0 = inlined_call_operand.hbm [shape: f32[16,128], index: 0, kind: input, shape index: {}]
  %s1 = inlined_call_operand.hbm [shape: f32[128,256], index: 1, kind: input, shape index: {}]
  %s2 = inlined_call_operand.vmem [shape: f32[1,256], index: 2, kind: input, shape index: {}]
  %s3 = inlined_call_operand.hbm [shape: f32[256,256], index: 3, kind: input, shape index: {}]
  %s4 = inlined_call_operand.vmem [shape: f32[1,256], index: 4, kind: input, shape index: {}]
  %s5 = inlined_call_operand.hbm [shape: f32[16,128], index: 5, kind: output, shape index: {}]
  %s6 = sld [smem:[#allocation0]]
  $region42: #{tpu_custom_call.1} parent=0
    _
  %s8 = ssub.s32 1, %s6
  %s9 = scalar_select 0, %s8, %s6
  $region1: #{tpu_custom_call.1} parent=0
    #allocation2 [shape = 'u8[8192]{0}', space=vmem, size = 0x2000, scoped, tag = 'input window, operand 0, single buffered']
    #allocation3 [shape = 's32[1]{0}', space=sflag, size = 0x4, scoped, tag = 'scoped memory for tpu_custom_call.1']
    #allocation4 [shape = 's32[1]{0}', space=sflag, size = 0x4, scoped, tag = 'scoped memory for tpu_custom_call.1']
    #allocation5 [shape = 'u8[131072]{0}', space=vmem, size = 0x20000, scoped, tag = 'input window, operand 1, single buffered']
    #allocation6 [shape = 's32[1]{0}', space=sflag, size = 0x4, scoped, tag = 'scoped memory for tpu_custom_call.1']
    #allocation7 [shape = 'u8[262144]{0}', space=vmem, size = 0x40000, scoped, tag = 'input window, operand 3, single buffered']
    #allocation8 [shape = 'u8[8192]{0}', space=vmem, size = 0x2000, scoped, tag = 'output window, operand 0, single buffered']
    %10 = vsyncpa [#allocation3], 0
    %11 = vsyncpa [#allocation6], 0
    %12 = vsyncpa [#allocation4], 0
    // Predicated region
    $region2: #{tpu_custom_call.1} parent=1 // pred_check
      _
    $region3: #{tpu_custom_call.1} parent=1 // pred_check_branch
      %14 = sbr.rel (0) target = $region5
    $region4: #{tpu_custom_call.1} parent=1 // pred_region
      %s16 = ssub.s32 256, 256
      %17 = vsyncadd [#allocation3], %s16
      %s18 = sshll.u32 [#allocation2], 4
      %s19 = int_to_ptr.vmem [resolvable:$true] %s18
      %24 = dma.hbm_to_vmem [thread:$0]  %s0, 256, %s19, [#allocation3], 128, 128, 8
    $region5: #{tpu_custom_call.1} parent=1 // pred_fallthru
      _
    // Predicated region
    $region6: #{tpu_custom_call.1} parent=1 // pred_check
      _
    $region7: #{tpu_custom_call.1} parent=1 // pred_check_branch
      %26 = sbr.rel (0) target = $region9
    $region8: #{tpu_custom_call.1} parent=1 // pred_region
      %s28 = ssub.s32 4096, 4096
      %29 = vsyncadd [#allocation6], %s28
      %s30 = sshll.u32 [#allocation5], 4
      %s31 = int_to_ptr.vmem [resolvable:$true] %s30
      %36 = dma.hbm_to_vmem [thread:$0]  %s1, 4096, %s31, [#allocation6], 256, 256, 16
    $region9: #{tpu_custom_call.1} parent=1 // pred_fallthru
      _
    // Predicated region
    $region10: #{tpu_custom_call.1} parent=1 // pred_check
      _
    $region11: #{tpu_custom_call.1} parent=1 // pred_check_branch
      %38 = sbr.rel (0) target = $region13
    $region12: #{tpu_custom_call.1} parent=1 // pred_region
      _
    $region13: #{tpu_custom_call.1} parent=1 // pred_fallthru
      _
    // Predicated region
    $region14: #{tpu_custom_call.1} parent=1 // pred_check
      _
    $region15: #{tpu_custom_call.1} parent=1 // pred_check_branch
      %40 = sbr.rel (0) target = $region17
    $region16: #{tpu_custom_call.1} parent=1 // pred_region
      %s42 = ssub.s32 8192, 8192
      %43 = vsyncadd [#allocation6], %s42
      %s44 = sshll.u32 [#allocation7], 4
      %s45 = int_to_ptr.vmem [resolvable:$true] %s44
      %50 = dma.hbm_to_vmem [thread:$0]  %s3, 8192, %s45, [#allocation6], 256, 256, 16
    $region17: #{tpu_custom_call.1} parent=1 // pred_fallthru
      _
    // Predicated region
    $region18: #{tpu_custom_call.1} parent=1 // pred_check
      _
    $region19: #{tpu_custom_call.1} parent=1 // pred_check_branch
      %52 = sbr.rel (0) target = $region21
    $region20: #{tpu_custom_call.1} parent=1 // pred_region
      _
    $region21: #{tpu_custom_call.1} parent=1 // pred_fallthru
      _
    // Predicated region
    $region22: #{tpu_custom_call.1} parent=1 // pred_check
      _
    $region23: #{tpu_custom_call.1} parent=1 // pred_check_branch
      %54 = sbr.rel (0) target = $region25
    $region24: #{tpu_custom_call.1} parent=1 // pred_region
      %55 = dma.done [#allocation3], 256
    $region25: #{tpu_custom_call.1} parent=1 // pred_fallthru
      _
    // Predicated region
    $region26: #{tpu_custom_call.1} parent=1 // pred_check
      _
    $region27: #{tpu_custom_call.1} parent=1 // pred_check_branch
      %57 = sbr.rel (0) target = $region29
    $region28: #{tpu_custom_call.1} parent=1 // pred_region
      %58 = dma.done [#allocation6], 4096
    $region29: #{tpu_custom_call.1} parent=1 // pred_fallthru
      _
    // Predicated region
    $region30: #{tpu_custom_call.1} parent=1 // pred_check
      _
    $region31: #{tpu_custom_call.1} parent=1 // pred_check_branch
      %60 = sbr.rel (0) target = $region33
    $region32: #{tpu_custom_call.1} parent=1 // pred_region
      %61 = dma.done [#allocation6], 8192
    $region33: #{tpu_custom_call.1} parent=1 // pred_fallthru
      _
    %v62 = vld [vmem:[#allocation2] sm:$0xff]
    %v63 = vld [vmem:[#allocation2 + $0x8] sm:$0xff]
    %v64 = vld [vmem:[#allocation5] sm:$0xff]
    %v65 = vld [vmem:[#allocation5 + $0x8] sm:$0xff]
    %v66 = vld [vmem:[#allocation5 + $0x10] sm:$0xff]
    %v67 = vld [vmem:[#allocation5 + $0x18] sm:$0xff]
    %v68 = vld [vmem:[#allocation5 + $0x20] sm:$0xff]
    %v69 = vld [vmem:[#allocation5 + $0x28] sm:$0xff]
    %v70 = vld [vmem:[#allocation5 + $0x30] sm:$0xff]
    %v71 = vld [vmem:[#allocation5 + $0x38] sm:$0xff]
    %v72 = vld [vmem:[#allocation5 + $0x40] sm:$0xff]
    %v73 = vld [vmem:[#allocation5 + $0x48] sm:$0xff]
    %v74 = vld [vmem:[#allocation5 + $0x50] sm:$0xff]
    %v75 = vld [vmem:[#allocation5 + $0x58] sm:$0xff]
    %v76 = vld [vmem:[#allocation5 + $0x60] sm:$0xff]
    %v77 = vld [vmem:[#allocation5 + $0x68] sm:$0xff]
    %v78 = vld [vmem:[#allocation5 + $0x70] sm:$0xff]
    %v79 = vld [vmem:[#allocation5 + $0x78] sm:$0xff]
    %v80 = vld [vmem:[#allocation5 + $0x80] sm:$0xff]
    %v81 = vld [vmem:[#allocation5 + $0x88] sm:$0xff]
    %v82 = vld [vmem:[#allocation5 + $0x90] sm:$0xff]
    %v83 = vld [vmem:[#allocation5 + $0x98] sm:$0xff]
    %v84 = vld [vmem:[#allocation5 + $0xa0] sm:$0xff]
    %v85 = vld [vmem:[#allocation5 + $0xa8] sm:$0xff]
    %v86 = vld [vmem:[#allocation5 + $0xb0] sm:$0xff]
    %v87 = vld [vmem:[#allocation5 + $0xb8] sm:$0xff]
    %v88 = vld [vmem:[#allocation5 + $0xc0] sm:$0xff]
    %v89 = vld [vmem:[#allocation5 + $0xc8] sm:$0xff]
    %v90 = vld [vmem:[#allocation5 + $0xd0] sm:$0xff]
    %v91 = vld [vmem:[#allocation5 + $0xd8] sm:$0xff]
    %v92 = vld [vmem:[#allocation5 + $0xe0] sm:$0xff]
    %v93 = vld [vmem:[#allocation5 + $0xe8] sm:$0xff]
    %v94 = vld [vmem:[#allocation5 + $0xf0] sm:$0xff]
    %v95 = vld [vmem:[#allocation5 + $0xf8] sm:$0xff]
    %v96 = vld [vmem:[%s2] sm:$0x3]
    %v98 = vlaneseq
    %v99 = vshrl.u32 %v98, 7
    %v100 = vsub.s32 0, %v99
    %v101 = vrot.slane %v96, %v100
    %v102 = vlaneseq
    %v103 = vshrl.u32 %v102, 7
    %v104 = vsub.s32 1, %v103
    %v105 = vrot.slane %v96, %v104
    %108 = vmatprep.subr.mxu0 %v95
    %109 = vmatpush1.msra.mxu0 %v94
    %110 = vmatprep.subr.mxu0 %v93
    %111 = vmatpush1.msra.mxu0 %v92
    %112 = vmatprep.subr.mxu0 %v91
    %113 = vmatpush1.msra.mxu0 %v90
    %114 = vmatprep.subr.mxu0 %v89
    %115 = vmatpush1.msra.mxu0 %v88
    %116 = vmatprep.subr.mxu0 %v87
    %117 = vmatpush1.msra.mxu0 %v86
    %118 = vmatprep.subr.mxu0 %v85
    %119 = vmatpush1.msra.mxu0 %v84
    %120 = vmatprep.subr.mxu0 %v83
    %121 = vmatpush1.msra.mxu0 %v82
    %122 = vmatprep.subr.mxu0 %v81
    %123 = vmatpush1.msra.mxu0 %v80
    %124 = vmatprep.subr.mxu0 %v79
    %125 = vmatpush1.msra.mxu0 %v78
    %126 = vmatprep.subr.mxu0 %v77
    %127 = vmatpush1.msra.mxu0 %v76
    %128 = vmatprep.subr.mxu0 %v75
    %129 = vmatpush1.msra.mxu0 %v74
    %130 = vmatprep.subr.mxu0 %v73
    %131 = vmatpush1.msra.mxu0 %v72
    %132 = vmatprep.subr.mxu0 %v71
    %133 = vmatpush1.msra.mxu0 %v70
    %134 = vmatprep.subr.mxu0 %v69
    %135 = vmatpush1.msra.mxu0 %v68
    %136 = vmatprep.subr.mxu0 %v67
    %137 = vmatpush1.msra.mxu0 %v66
    %138 = vmatprep.subr.mxu0 %v65
    %139 = vmatpush1.msra.mxu0 %v64
    %140 = vmatprep.subr.mxu0 0.0
    %141 = vmatpush2.msra.mxu0 0.0
    %142 = vmatprep.subr.mxu0 0.0
    %143 = vmatpush2.msra.mxu0 0.0
    %144 = vmatprep.subr.mxu0 0.0
    %145 = vmatpush2.msra.mxu0 0.0
    %146 = vmatprep.subr.mxu0 0.0
    %147 = vmatpush2.msra.mxu0 0.0
    %148 = vmatprep.subr.mxu0 0.0
    %149 = vmatpush2.msra.mxu0 0.0
    %150 = vmatprep.subr.mxu0 0.0
    %151 = vmatpush2.msra.mxu0 0.0
    %152 = vmatprep.subr.mxu0 0.0
    %153 = vmatpush2.msra.mxu0 0.0
    %154 = vmatprep.subr.mxu0 0.0
    %155 = vmatpush2.msra.mxu0 0.0
    %156 = vmatprep.subr.mxu0 0.0
    %157 = vmatpush2.msra.mxu0 0.0
    %158 = vmatprep.subr.mxu0 0.0
    %159 = vmatpush2.msra.mxu0 0.0
    %160 = vmatprep.subr.mxu0 0.0
    %161 = vmatpush2.msra.mxu0 0.0
    %162 = vmatprep.subr.mxu0 0.0
    %163 = vmatpush2.msra.mxu0 0.0
    %164 = vmatprep.subr.mxu0 0.0
    %165 = vmatpush2.msra.mxu0 0.0
    %166 = vmatprep.subr.mxu0 0.0
    %167 = vmatpush2.msra.mxu0 0.0
    %168 = vmatprep.subr.mxu0 0.0
    %169 = vmatpush2.msra.mxu0 0.0
    %170 = vmatprep.subr.mxu0 0.0
    %171 = vmatpush2.msra.mxu0 0.0
    %172 = vmatprep.mubr.f32.mxu0 0.0
    %173 = vmatmul.mubr.f32.gmra.mxu0 %v62
    %v174 = vpop.f32.mrf.mxu0
    %v175 = vadd.f32 %v101, %v174
    %v176 = vpop.f32.mrf.mxu0
    %v177 = vadd.f32 %v105, %v176
    %178 = vmatprep.mubr.f32.mxu0 0.0
    %179 = vmatmul.mubr.f32.gmra.mxu0 %v63
    %v180 = vpop.f32.mrf.mxu0
    %v181 = vadd.f32 %v101, %v180
    %v182 = vpop.f32.mrf.mxu0
    %v183 = vadd.f32 %v105, %v182
    %184 = vdwg.mxu0
    %v185 = vtanh.pop %v175
    %v186 = vtanh.pop %v177
    %v187 = vtanh.pop %v181
    %v188 = vtanh.pop %v183
    %v189 = vld [vmem:[#allocation7] sm:$0xff]
    %v190 = vld [vmem:[#allocation7 + $0x8] sm:$0xff]
    %v191 = vld [vmem:[#allocation7 + $0x10] sm:$0xff]
    %v192 = vld [vmem:[#allocation7 + $0x18] sm:$0xff]
    %v193 = vld [vmem:[#allocation7 + $0x20] sm:$0xff]
    %v194 = vld [vmem:[#allocation7 + $0x28] sm:$0xff]
    %v195 = vld [vmem:[#allocation7 + $0x30] sm:$0xff]
    %v196 = vld [vmem:[#allocation7 + $0x38] sm:$0xff]
    %v197 = vld [vmem:[#allocation7 + $0x40] sm:$0xff]
    %v198 = vld [vmem:[#allocation7 + $0x48] sm:$0xff]
    %v199 = vld [vmem:[#allocation7 + $0x50] sm:$0xff]
    %v200 = vld [vmem:[#allocation7 + $0x58] sm:$0xff]
    %v201 = vld [vmem:[#allocation7 + $0x60] sm:$0xff]
    %v202 = vld [vmem:[#allocation7 + $0x68] sm:$0xff]
    %v203 = vld [vmem:[#allocation7 + $0x70] sm:$0xff]
    %v204 = vld [vmem:[#allocation7 + $0x78] sm:$0xff]
    %v205 = vld [vmem:[#allocation7 + $0x80] sm:$0xff]
    %v206 = vld [vmem:[#allocation7 + $0x88] sm:$0xff]
    %v207 = vld [vmem:[#allocation7 + $0x90] sm:$0xff]
    %v208 = vld [vmem:[#allocation7 + $0x98] sm:$0xff]
    %v209 = vld [vmem:[#allocation7 + $0xa0] sm:$0xff]
    %v210 = vld [vmem:[#allocation7 + $0xa8] sm:$0xff]
    %v211 = vld [vmem:[#allocation7 + $0xb0] sm:$0xff]
    %v212 = vld [vmem:[#allocation7 + $0xb8] sm:$0xff]
    %v213 = vld [vmem:[#allocation7 + $0xc0] sm:$0xff]
    %v214 = vld [vmem:[#allocation7 + $0xc8] sm:$0xff]
    %v215 = vld [vmem:[#allocation7 + $0xd0] sm:$0xff]
    %v216 = vld [vmem:[#allocation7 + $0xd8] sm:$0xff]
    %v217 = vld [vmem:[#allocation7 + $0xe0] sm:$0xff]
    %v218 = vld [vmem:[#allocation7 + $0xe8] sm:$0xff]
    %v219 = vld [vmem:[#allocation7 + $0xf0] sm:$0xff]
    %v220 = vld [vmem:[#allocation7 + $0xf8] sm:$0xff]
    %v221 = vld [vmem:[#allocation7 + $0x100] sm:$0xff]
    %v222 = vld [vmem:[#allocation7 + $0x108] sm:$0xff]
    %v223 = vld [vmem:[#allocation7 + $0x110] sm:$0xff]
    %v224 = vld [vmem:[#allocation7 + $0x118] sm:$0xff]
    %v225 = vld [vmem:[#allocation7 + $0x120] sm:$0xff]
    %v226 = vld [vmem:[#allocation7 + $0x128] sm:$0xff]
    %v227 = vld [vmem:[#allocation7 + $0x130] sm:$0xff]
    %v228 = vld [vmem:[#allocation7 + $0x138] sm:$0xff]
    %v229 = vld [vmem:[#allocation7 + $0x140] sm:$0xff]
    %v230 = vld [vmem:[#allocation7 + $0x148] sm:$0xff]
    %v231 = vld [vmem:[#allocation7 + $0x150] sm:$0xff]
    %v232 = vld [vmem:[#allocation7 + $0x158] sm:$0xff]
    %v233 = vld [vmem:[#allocation7 + $0x160] sm:$0xff]
    %v234 = vld [vmem:[#allocation7 + $0x168] sm:$0xff]
    %v235 = vld [vmem:[#allocation7 + $0x170] sm:$0xff]
    %v236 = vld [vmem:[#allocation7 + $0x178] sm:$0xff]
    %v237 = vld [vmem:[#allocation7 + $0x180] sm:$0xff]
    %v238 = vld [vmem:[#allocation7 + $0x188] sm:$0xff]
    %v239 = vld [vmem:[#allocation7 + $0x190] sm:$0xff]
    %v240 = vld [vmem:[#allocation7 + $0x198] sm:$0xff]
    %v241 = vld [vmem:[#allocation7 + $0x1a0] sm:$0xff]
    %v242 = vld [vmem:[#allocation7 + $0x1a8] sm:$0xff]
    %v243 = vld [vmem:[#allocation7 + $0x1b0] sm:$0xff]
    %v244 = vld [vmem:[#allocation7 + $0x1b8] sm:$0xff]
    %v245 = vld [vmem:[#allocation7 + $0x1c0] sm:$0xff]
    %v246 = vld [vmem:[#allocation7 + $0x1c8] sm:$0xff]
    %v247 = vld [vmem:[#allocation7 + $0x1d0] sm:$0xff]
    %v248 = vld [vmem:[#allocation7 + $0x1d8] sm:$0xff]
    %v249 = vld [vmem:[#allocation7 + $0x1e0] sm:$0xff]
    %v250 = vld [vmem:[#allocation7 + $0x1e8] sm:$0xff]
    %v251 = vld [vmem:[#allocation7 + $0x1f0] sm:$0xff]
    %v252 = vld [vmem:[#allocation7 + $0x1f8] sm:$0xff]
    %v253 = vld [vmem:[%s4] sm:$0x3]
    %v255 = vlaneseq
    %v256 = vshrl.u32 %v255, 7
    %v257 = vsub.s32 0, %v256
    %v258 = vrot.slane %v253, %v257
    %v259 = vlaneseq
    %v260 = vshrl.u32 %v259, 7
    %v261 = vsub.s32 1, %v260
    %v262 = vrot.slane %v253, %v261
    %265 = vmatprep.subr.mxu0 %v220
    %266 = vmatpush1.msra.mxu0 %v219
    %267 = vmatprep.subr.mxu0 %v218
    %268 = vmatpush1.msra.mxu0 %v217
    %269 = vmatprep.subr.mxu0 %v216
    %270 = vmatpush1.msra.mxu0 %v215
    %271 = vmatprep.subr.mxu0 %v214
    %272 = vmatpush1.msra.mxu0 %v213
    %273 = vmatprep.subr.mxu0 %v212
    %274 = vmatpush1.msra.mxu0 %v211
    %275 = vmatprep.subr.mxu0 %v210
    %276 = vmatpush1.msra.mxu0 %v209
    %277 = vmatprep.subr.mxu0 %v208
    %278 = vmatpush1.msra.mxu0 %v207
    %279 = vmatprep.subr.mxu0 %v206
    %280 = vmatpush1.msra.mxu0 %v205
    %281 = vmatprep.subr.mxu0 %v204
    %282 = vmatpush1.msra.mxu0 %v203
    %283 = vmatprep.subr.mxu0 %v202
    %284 = vmatpush1.msra.mxu0 %v201
    %285 = vmatprep.subr.mxu0 %v200
    %286 = vmatpush1.msra.mxu0 %v199
    %287 = vmatprep.subr.mxu0 %v198
    %288 = vmatpush1.msra.mxu0 %v197
    %289 = vmatprep.subr.mxu0 %v196
    %290 = vmatpush1.msra.mxu0 %v195
    %291 = vmatprep.subr.mxu0 %v194
    %292 = vmatpush1.msra.mxu0 %v193
    %293 = vmatprep.subr.mxu0 %v192
    %294 = vmatpush1.msra.mxu0 %v191
    %295 = vmatprep.subr.mxu0 %v190
    %296 = vmatpush1.msra.mxu0 %v189
    %297 = vmatprep.subr.mxu0 %v252
    %298 = vmatpush2.msra.mxu0 %v251
    %299 = vmatprep.subr.mxu0 %v250
    %300 = vmatpush2.msra.mxu0 %v249
    %301 = vmatprep.subr.mxu0 %v248
    %302 = vmatpush2.msra.mxu0 %v247
    %303 = vmatprep.subr.mxu0 %v246
    %304 = vmatpush2.msra.mxu0 %v245
    %305 = vmatprep.subr.mxu0 %v244
    %306 = vmatpush2.msra.mxu0 %v243
    %307 = vmatprep.subr.mxu0 %v242
    %308 = vmatpush2.msra.mxu0 %v241
    %309 = vmatprep.subr.mxu0 %v240
    %310 = vmatpush2.msra.mxu0 %v239
    %311 = vmatprep.subr.mxu0 %v238
    %312 = vmatpush2.msra.mxu0 %v237
    %313 = vmatprep.subr.mxu0 %v236
    %314 = vmatpush2.msra.mxu0 %v235
    %315 = vmatprep.subr.mxu0 %v234
    %316 = vmatpush2.msra.mxu0 %v233
    %317 = vmatprep.subr.mxu0 %v232
    %318 = vmatpush2.msra.mxu0 %v231
    %319 = vmatprep.subr.mxu0 %v230
    %320 = vmatpush2.msra.mxu0 %v229
    %321 = vmatprep.subr.mxu0 %v228
    %322 = vmatpush2.msra.mxu0 %v227
    %323 = vmatprep.subr.mxu0 %v226
    %324 = vmatpush2.msra.mxu0 %v225
    %325 = vmatprep.subr.mxu0 %v224
    %326 = vmatpush2.msra.mxu0 %v223
    %327 = vmatprep.subr.mxu0 %v222
    %328 = vmatpush2.msra.mxu0 %v221
    %329 = vmatprep.mubr.f32.mxu0 %v186
    %330 = vmatmul.mubr.f32.gmra.mxu0 %v185
    %v331 = vpop.f32.mrf.mxu0
    %v332 = vadd.f32 %v258, %v331
    %v333 = vpop.f32.mrf.mxu0
    %v334 = vadd.f32 %v262, %v333
    %335 = vmatprep.mubr.f32.mxu0 %v188
    %336 = vmatmul.mubr.f32.gmra.mxu0 %v187
    %v337 = vpop.f32.mrf.mxu0
    %v338 = vadd.f32 %v258, %v337
    %v339 = vpop.f32.mrf.mxu0
    %v340 = vadd.f32 %v262, %v339
    %341 = vdwg.mxu0
    %v342 = vmul.f32 %v334, 0.5
    %v343 = vmul.f32 %v340, 0.5
    %v344 = vtanh.pop %v342
    %v345 = vtanh.pop %v343
    %v346 = vmul.f32 %v344, 0.5
    %v347 = vmul.f32 %v345, 0.5
    %v348 = vadd.f32 %v346, 0.5
    %v349 = vadd.f32 %v347, 0.5
    %v350 = vmul.f32 %v332, %v348
    %v351 = vmul.f32 %v338, %v349
    %352 = vst [vmem:[#allocation8] sm:$0xff] %v350
    %353 = vst [vmem:[#allocation8 + $0x8] sm:$0xff] %v351
    // Predicated region
    $region34: #{tpu_custom_call.1} parent=1 // pred_check
      _
    $region35: #{tpu_custom_call.1} parent=1 // pred_check_branch
      %355 = sbr.rel (0) target = $region37
    $region36: #{tpu_custom_call.1} parent=1 // pred_region
      %s357 = ssub.s32 256, 256
      %358 = vsyncadd [#allocation4], %s357
      %s359 = sshll.u32 [#allocation8], 4
      %s360 = int_to_ptr.vmem [resolvable:$true] %s359
      %365 = dma.vmem_to_hbm [thread:$0]  %s360, 256, %s5, [#allocation4], 128, 128, 8
    $region37: #{tpu_custom_call.1} parent=1 // pred_fallthru
      _
    // Predicated region
    $region38: #{tpu_custom_call.1} parent=1 // pred_check
      _
    $region39: #{tpu_custom_call.1} parent=1 // pred_check_branch
      %367 = sbr.rel (0) target = $region41
    $region40: #{tpu_custom_call.1} parent=1 // pred_region
      %368 = dma.done [#allocation4], 256
    $region41: #{tpu_custom_call.1} parent=1 // pred_fallthru
      _
    %369 = vsyncpa [#allocation3], 1
    %370 = vsyncpa [#allocation6], 1
    %371 = vsyncpa [#allocation4], 1

// kernel: tpu_custom_call.1
$region0: #{tpu_custom_call.1}
  #allocation0 [shape = 'u32[]', space=smem, size = 0x4, offset = 0x4, fixed_abs, tag = 'smem constant byte address 0x4 - core index']
  #allocation1 [shape = 'u32[144,128]{1,0:T(1,128)}', space=vmem, size = 0x12000, scoped, tag = 'internal scratch']
  %s0 = inlined_call_operand.hbm [shape: f32[16,128], index: 0, kind: input, shape index: {}]
  %s1 = inlined_call_operand.hbm [shape: f32[128,256], index: 1, kind: input, shape index: {}]
  %s2 = inlined_call_operand.vmem [shape: f32[1,256], index: 2, kind: input, shape index: {}]
  %s3 = inlined_call_operand.hbm [shape: f32[256,256], index: 3, kind: input, shape index: {}]
  %s4 = inlined_call_operand.vmem [shape: f32[1,256], index: 4, kind: input, shape index: {}]
  %s5 = inlined_call_operand.hbm [shape: f32[16,128], index: 5, kind: output, shape index: {}]
  %s6 = sld [smem:[#allocation0]]
  $region42: #{tpu_custom_call.1} parent=0
    _
  %s8 = ssub.s32 1, %s6
  %s9 = scalar_select 0, %s8, %s6
  $region1: #{tpu_custom_call.1} parent=0
    #allocation2 [shape = 'u8[8192]{0}', space=vmem, size = 0x2000, scoped, tag = 'input window, operand 0, single buffered']
    #allocation3 [shape = 's32[1]{0}', space=sflag, size = 0x4, scoped, tag = 'scoped memory for tpu_custom_call.1']
    #allocation4 [shape = 's32[1]{0}', space=sflag, size = 0x4, scoped, tag = 'scoped memory for tpu_custom_call.1']
    #allocation5 [shape = 'u8[131072]{0}', space=vmem, size = 0x20000, scoped, tag = 'input window, operand 1, single buffered']
    #allocation6 [shape = 's32[1]{0}', space=sflag, size = 0x4, scoped, tag = 'scoped memory for tpu_custom_call.1']
    #allocation7 [shape = 'u8[262144]{0}', space=vmem, size = 0x40000, scoped, tag = 'input window, operand 3, single buffered']
    #allocation8 [shape = 'u8[8192]{0}', space=vmem, size = 0x2000, scoped, tag = 'output window, operand 0, single buffered']
    %10 = vsyncpa [#allocation3], 0
    %11 = vsyncpa [#allocation6], 0
    %12 = vsyncpa [#allocation4], 0
    // Predicated region
    $region2: #{tpu_custom_call.1} parent=1 // pred_check
      _
    $region3: #{tpu_custom_call.1} parent=1 // pred_check_branch
      %14 = sbr.rel (0) target = $region5
    $region4: #{tpu_custom_call.1} parent=1 // pred_region
      %s16 = ssub.s32 256, 256
      %17 = vsyncadd [#allocation3], %s16
      %s18 = sshll.u32 [#allocation2], 4
      %s19 = int_to_ptr.vmem [resolvable:$true] %s18
      %24 = dma.hbm_to_vmem [thread:$0]  %s0, 256, %s19, [#allocation3], 128, 128, 8
    $region5: #{tpu_custom_call.1} parent=1 // pred_fallthru
      _
    // Predicated region
    $region6: #{tpu_custom_call.1} parent=1 // pred_check
      _
    $region7: #{tpu_custom_call.1} parent=1 // pred_check_branch
      %26 = sbr.rel (0) target = $region9
    $region8: #{tpu_custom_call.1} parent=1 // pred_region
      %s28 = ssub.s32 4096, 4096
      %29 = vsyncadd [#allocation6], %s28
      %s30 = sshll.u32 [#allocation5], 4
      %s31 = int_to_ptr.vmem [resolvable:$true] %s30
      %36 = dma.hbm_to_vmem [thread:$0]  %s1, 4096, %s31, [#allocation6], 256, 256, 16
    $region9: #{tpu_custom_call.1} parent=1 // pred_fallthru
      _
    // Predicated region
    $region10: #{tpu_custom_call.1} parent=1 // pred_check
      _
    $region11: #{tpu_custom_call.1} parent=1 // pred_check_branch
      %38 = sbr.rel (0) target = $region13
    $region12: #{tpu_custom_call.1} parent=1 // pred_region
      _
    $region13: #{tpu_custom_call.1} parent=1 // pred_fallthru
      _
    // Predicated region
    $region14: #{tpu_custom_call.1} parent=1 // pred_check
      _
    $region15: #{tpu_custom_call.1} parent=1 // pred_check_branch
      %40 = sbr.rel (0) target = $region17
    $region16: #{tpu_custom_call.1} parent=1 // pred_region
      %s42 = ssub.s32 8192, 8192
      %43 = vsyncadd [#allocation6], %s42
      %s44 = sshll.u32 [#allocation7], 4
      %s45 = int_to_ptr.vmem [resolvable:$true] %s44
      %50 = dma.hbm_to_vmem [thread:$0]  %s3, 8192, %s45, [#allocation6], 256, 256, 16
    $region17: #{tpu_custom_call.1} parent=1 // pred_fallthru
      _
    // Predicated region
    $region18: #{tpu_custom_call.1} parent=1 // pred_check
      _
    $region19: #{tpu_custom_call.1} parent=1 // pred_check_branch
      %52 = sbr.rel (0) target = $region21
    $region20: #{tpu_custom_call.1} parent=1 // pred_region
      _
    $region21: #{tpu_custom_call.1} parent=1 // pred_fallthru
      _
    // Predicated region
    $region22: #{tpu_custom_call.1} parent=1 // pred_check
      _
    $region23: #{tpu_custom_call.1} parent=1 // pred_check_branch
      %54 = sbr.rel (0) target = $region25
    $region24: #{tpu_custom_call.1} parent=1 // pred_region
      %55 = dma.done [#allocation3], 256
    $region25: #{tpu_custom_call.1} parent=1 // pred_fallthru
      _
    // Predicated region
    $region26: #{tpu_custom_call.1} parent=1 // pred_check
      _
    $region27: #{tpu_custom_call.1} parent=1 // pred_check_branch
      %57 = sbr.rel (0) target = $region29
    $region28: #{tpu_custom_call.1} parent=1 // pred_region
      %58 = dma.done [#allocation6], 4096
    $region29: #{tpu_custom_call.1} parent=1 // pred_fallthru
      _
    // Predicated region
    $region30: #{tpu_custom_call.1} parent=1 // pred_check
      _
    $region31: #{tpu_custom_call.1} parent=1 // pred_check_branch
      %60 = sbr.rel (0) target = $region33
    $region32: #{tpu_custom_call.1} parent=1 // pred_region
      %61 = dma.done [#allocation6], 8192
    $region33: #{tpu_custom_call.1} parent=1 // pred_fallthru
      _
    %v62 = vld [vmem:[#allocation2] sm:$0xff]
    %v63 = vld [vmem:[#allocation2 + $0x8] sm:$0xff]
    %v64 = vld [vmem:[#allocation5] sm:$0xff]
    %v65 = vld [vmem:[#allocation5 + $0x8] sm:$0xff]
    %v66 = vld [vmem:[#allocation5 + $0x10] sm:$0xff]
    %v67 = vld [vmem:[#allocation5 + $0x18] sm:$0xff]
    %v68 = vld [vmem:[#allocation5 + $0x20] sm:$0xff]
    %v69 = vld [vmem:[#allocation5 + $0x28] sm:$0xff]
    %v70 = vld [vmem:[#allocation5 + $0x30] sm:$0xff]
    %v71 = vld [vmem:[#allocation5 + $0x38] sm:$0xff]
    %v72 = vld [vmem:[#allocation5 + $0x40] sm:$0xff]
    %v73 = vld [vmem:[#allocation5 + $0x48] sm:$0xff]
    %v74 = vld [vmem:[#allocation5 + $0x50] sm:$0xff]
    %v75 = vld [vmem:[#allocation5 + $0x58] sm:$0xff]
    %v76 = vld [vmem:[#allocation5 + $0x60] sm:$0xff]
    %v77 = vld [vmem:[#allocation5 + $0x68] sm:$0xff]
    %v78 = vld [vmem:[#allocation5 + $0x70] sm:$0xff]
    %v79 = vld [vmem:[#allocation5 + $0x78] sm:$0xff]
    %v80 = vld [vmem:[#allocation5 + $0x80] sm:$0xff]
    %v81 = vld [vmem:[#allocation5 + $0x88] sm:$0xff]
    %v82 = vld [vmem:[#allocation5 + $0x90] sm:$0xff]
    %v83 = vld [vmem:[#allocation5 + $0x98] sm:$0xff]
    %v84 = vld [vmem:[#allocation5 + $0xa0] sm:$0xff]
    %v85 = vld [vmem:[#allocation5 + $0xa8] sm:$0xff]
    %v86 = vld [vmem:[#allocation5 + $0xb0] sm:$0xff]
    %v87 = vld [vmem:[#allocation5 + $0xb8] sm:$0xff]
    %v88 = vld [vmem:[#allocation5 + $0xc0] sm:$0xff]
    %v89 = vld [vmem:[#allocation5 + $0xc8] sm:$0xff]
    %v90 = vld [vmem:[#allocation5 + $0xd0] sm:$0xff]
    %v91 = vld [vmem:[#allocation5 + $0xd8] sm:$0xff]
    %v92 = vld [vmem:[#allocation5 + $0xe0] sm:$0xff]
    %v93 = vld [vmem:[#allocation5 + $0xe8] sm:$0xff]
    %v94 = vld [vmem:[#allocation5 + $0xf0] sm:$0xff]
    %v95 = vld [vmem:[#allocation5 + $0xf8] sm:$0xff]
    %v96 = vld [vmem:[%s2] sm:$0x3]
    %v98 = vlaneseq
    %v99 = vshrl.u32 %v98, 7
    %v100 = vsub.s32 0, %v99
    %v101 = vrot.slane %v96, %v100
    %v102 = vlaneseq
    %v103 = vshrl.u32 %v102, 7
    %v104 = vsub.s32 1, %v103
    %v105 = vrot.slane %v96, %v104
    %108 = vmatprep.subr.mxu0 %v95
    %109 = vmatpush1.msra.mxu0 %v94
    %110 = vmatprep.subr.mxu0 %v93
    %111 = vmatpush1.msra.mxu0 %v92
    %112 = vmatprep.subr.mxu0 %v91
    %113 = vmatpush1.msra.mxu0 %v90
    %114 = vmatprep.subr.mxu0 %v89
    %115 = vmatpush1.msra.mxu0 %v88
    %116 = vmatprep.subr.mxu0 %v87
    %117 = vmatpush1.msra.mxu0 %v86
    %118 = vmatprep.subr.mxu0 %v85
    %119 = vmatpush1.msra.mxu0 %v84
    %120 = vmatprep.subr.mxu0 %v83
    %121 = vmatpush1.msra.mxu0 %v82
    %122 = vmatprep.subr.mxu0 %v81
    %123 = vmatpush1.msra.mxu0 %v80
    %124 = vmatprep.subr.mxu0 %v79
    %125 = vmatpush1.msra.mxu0 %v78
    %126 = vmatprep.subr.mxu0 %v77
    %127 = vmatpush1.msra.mxu0 %v76
    %128 = vmatprep.subr.mxu0 %v75
    %129 = vmatpush1.msra.mxu0 %v74
    %130 = vmatprep.subr.mxu0 %v73
    %131 = vmatpush1.msra.mxu0 %v72
    %132 = vmatprep.subr.mxu0 %v71
    %133 = vmatpush1.msra.mxu0 %v70
    %134 = vmatprep.subr.mxu0 %v69
    %135 = vmatpush1.msra.mxu0 %v68
    %136 = vmatprep.subr.mxu0 %v67
    %137 = vmatpush1.msra.mxu0 %v66
    %138 = vmatprep.subr.mxu0 %v65
    %139 = vmatpush1.msra.mxu0 %v64
    %140 = vmatprep.subr.mxu0 0.0
    %141 = vmatpush2.msra.mxu0 0.0
    %142 = vmatprep.subr.mxu0 0.0
    %143 = vmatpush2.msra.mxu0 0.0
    %144 = vmatprep.subr.mxu0 0.0
    %145 = vmatpush2.msra.mxu0 0.0
    %146 = vmatprep.subr.mxu0 0.0
    %147 = vmatpush2.msra.mxu0 0.0
    %148 = vmatprep.subr.mxu0 0.0
    %149 = vmatpush2.msra.mxu0 0.0
    %150 = vmatprep.subr.mxu0 0.0
    %151 = vmatpush2.msra.mxu0 0.0
    %152 = vmatprep.subr.mxu0 0.0
    %153 = vmatpush2.msra.mxu0 0.0
    %154 = vmatprep.subr.mxu0 0.0
    %155 = vmatpush2.msra.mxu0 0.0
    %156 = vmatprep.subr.mxu0 0.0
    %157 = vmatpush2.msra.mxu0 0.0
    %158 = vmatprep.subr.mxu0 0.0
    %159 = vmatpush2.msra.mxu0 0.0
    %160 = vmatprep.subr.mxu0 0.0
    %161 = vmatpush2.msra.mxu0 0.0
    %162 = vmatprep.subr.mxu0 0.0
    %163 = vmatpush2.msra.mxu0 0.0
    %164 = vmatprep.subr.mxu0 0.0
    %165 = vmatpush2.msra.mxu0 0.0
    %166 = vmatprep.subr.mxu0 0.0
    %167 = vmatpush2.msra.mxu0 0.0
    %168 = vmatprep.subr.mxu0 0.0
    %169 = vmatpush2.msra.mxu0 0.0
    %170 = vmatprep.subr.mxu0 0.0
    %171 = vmatpush2.msra.mxu0 0.0
    %172 = vmatprep.mubr.f32.mxu0 0.0
    %173 = vmatmul.mubr.f32.gmra.mxu0 %v62
    %v174 = vpop.f32.mrf.mxu0
    %v175 = vadd.f32 %v101, %v174
    %v176 = vpop.f32.mrf.mxu0
    %v177 = vadd.f32 %v105, %v176
    %178 = vmatprep.mubr.f32.mxu0 0.0
    %179 = vmatmul.mubr.f32.gmra.mxu0 %v63
    %v180 = vpop.f32.mrf.mxu0
    %v181 = vadd.f32 %v101, %v180
    %v182 = vpop.f32.mrf.mxu0
    %v183 = vadd.f32 %v105, %v182
    %184 = vdwg.mxu0
    %v185 = vtanh.pop %v175
    %v186 = vtanh.pop %v177
    %v187 = vtanh.pop %v181
    %v188 = vtanh.pop %v183
    %v189 = vld [vmem:[#allocation7] sm:$0xff]
    %v190 = vld [vmem:[#allocation7 + $0x8] sm:$0xff]
    %v191 = vld [vmem:[#allocation7 + $0x10] sm:$0xff]
    %v192 = vld [vmem:[#allocation7 + $0x18] sm:$0xff]
    %v193 = vld [vmem:[#allocation7 + $0x20] sm:$0xff]
    %v194 = vld [vmem:[#allocation7 + $0x28] sm:$0xff]
    %v195 = vld [vmem:[#allocation7 + $0x30] sm:$0xff]
    %v196 = vld [vmem:[#allocation7 + $0x38] sm:$0xff]
    %v197 = vld [vmem:[#allocation7 + $0x40] sm:$0xff]
    %v198 = vld [vmem:[#allocation7 + $0x48] sm:$0xff]
    %v199 = vld [vmem:[#allocation7 + $0x50] sm:$0xff]
    %v200 = vld [vmem:[#allocation7 + $0x58] sm:$0xff]
    %v201 = vld [vmem:[#allocation7 + $0x60] sm:$0xff]
    %v202 = vld [vmem:[#allocation7 + $0x68] sm:$0xff]
    %v203 = vld [vmem:[#allocation7 + $0x70] sm:$0xff]
    %v204 = vld [vmem:[#allocation7 + $0x78] sm:$0xff]
    %v205 = vld [vmem:[#allocation7 + $0x80] sm:$0xff]
    %v206 = vld [vmem:[#allocation7 + $0x88] sm:$0xff]
    %v207 = vld [vmem:[#allocation7 + $0x90] sm:$0xff]
    %v208 = vld [vmem:[#allocation7 + $0x98] sm:$0xff]
    %v209 = vld [vmem:[#allocation7 + $0xa0] sm:$0xff]
    %v210 = vld [vmem:[#allocation7 + $0xa8] sm:$0xff]
    %v211 = vld [vmem:[#allocation7 + $0xb0] sm:$0xff]
    %v212 = vld [vmem:[#allocation7 + $0xb8] sm:$0xff]
    %v213 = vld [vmem:[#allocation7 + $0xc0] sm:$0xff]
    %v214 = vld [vmem:[#allocation7 + $0xc8] sm:$0xff]
    %v215 = vld [vmem:[#allocation7 + $0xd0] sm:$0xff]
    %v216 = vld [vmem:[#allocation7 + $0xd8] sm:$0xff]
    %v217 = vld [vmem:[#allocation7 + $0xe0] sm:$0xff]
    %v218 = vld [vmem:[#allocation7 + $0xe8] sm:$0xff]
    %v219 = vld [vmem:[#allocation7 + $0xf0] sm:$0xff]
    %v220 = vld [vmem:[#allocation7 + $0xf8] sm:$0xff]
    %v221 = vld [vmem:[#allocation7 + $0x100] sm:$0xff]
    %v222 = vld [vmem:[#allocation7 + $0x108] sm:$0xff]
    %v223 = vld [vmem:[#allocation7 + $0x110] sm:$0xff]
    %v224 = vld [vmem:[#allocation7 + $0x118] sm:$0xff]
    %v225 = vld [vmem:[#allocation7 + $0x120] sm:$0xff]
    %v226 = vld [vmem:[#allocation7 + $0x128] sm:$0xff]
    %v227 = vld [vmem:[#allocation7 + $0x130] sm:$0xff]
    %v228 = vld [vmem:[#allocation7 + $0x138] sm:$0xff]
    %v229 = vld [vmem:[#allocation7 + $0x140] sm:$0xff]
    %v230 = vld [vmem:[#allocation7 + $0x148] sm:$0xff]
    %v231 = vld [vmem:[#allocation7 + $0x150] sm:$0xff]
    %v232 = vld [vmem:[#allocation7 + $0x158] sm:$0xff]
    %v233 = vld [vmem:[#allocation7 + $0x160] sm:$0xff]
    %v234 = vld [vmem:[#allocation7 + $0x168] sm:$0xff]
    %v235 = vld [vmem:[#allocation7 + $0x170] sm:$0xff]
    %v236 = vld [vmem:[#allocation7 + $0x178] sm:$0xff]
    %v237 = vld [vmem:[#allocation7 + $0x180] sm:$0xff]
    %v238 = vld [vmem:[#allocation7 + $0x188] sm:$0xff]
    %v239 = vld [vmem:[#allocation7 + $0x190] sm:$0xff]
    %v240 = vld [vmem:[#allocation7 + $0x198] sm:$0xff]
    %v241 = vld [vmem:[#allocation7 + $0x1a0] sm:$0xff]
    %v242 = vld [vmem:[#allocation7 + $0x1a8] sm:$0xff]
    %v243 = vld [vmem:[#allocation7 + $0x1b0] sm:$0xff]
    %v244 = vld [vmem:[#allocation7 + $0x1b8] sm:$0xff]
    %v245 = vld [vmem:[#allocation7 + $0x1c0] sm:$0xff]
    %v246 = vld [vmem:[#allocation7 + $0x1c8] sm:$0xff]
    %v247 = vld [vmem:[#allocation7 + $0x1d0] sm:$0xff]
    %v248 = vld [vmem:[#allocation7 + $0x1d8] sm:$0xff]
    %v249 = vld [vmem:[#allocation7 + $0x1e0] sm:$0xff]
    %v250 = vld [vmem:[#allocation7 + $0x1e8] sm:$0xff]
    %v251 = vld [vmem:[#allocation7 + $0x1f0] sm:$0xff]
    %v252 = vld [vmem:[#allocation7 + $0x1f8] sm:$0xff]
    %v253 = vld [vmem:[%s4] sm:$0x3]
    %v255 = vlaneseq
    %v256 = vshrl.u32 %v255, 7
    %v257 = vsub.s32 0, %v256
    %v258 = vrot.slane %v253, %v257
    %v259 = vlaneseq
    %v260 = vshrl.u32 %v259, 7
    %v261 = vsub.s32 1, %v260
    %v262 = vrot.slane %v253, %v261
    %265 = vmatprep.subr.mxu0 %v220
    %266 = vmatpush1.msra.mxu0 %v219
    %267 = vmatprep.subr.mxu0 %v218
    %268 = vmatpush1.msra.mxu0 %v217
    %269 = vmatprep.subr.mxu0 %v216
    %270 = vmatpush1.msra.mxu0 %v215
    %271 = vmatprep.subr.mxu0 %v214
    %272 = vmatpush1.msra.mxu0 %v213
    %273 = vmatprep.subr.mxu0 %v212
    %274 = vmatpush1.msra.mxu0 %v211
    %275 = vmatprep.subr.mxu0 %v210
    %276 = vmatpush1.msra.mxu0 %v209
    %277 = vmatprep.subr.mxu0 %v208
    %278 = vmatpush1.msra.mxu0 %v207
    %279 = vmatprep.subr.mxu0 %v206
    %280 = vmatpush1.msra.mxu0 %v205
    %281 = vmatprep.subr.mxu0 %v204
    %282 = vmatpush1.msra.mxu0 %v203
    %283 = vmatprep.subr.mxu0 %v202
    %284 = vmatpush1.msra.mxu0 %v201
    %285 = vmatprep.subr.mxu0 %v200
    %286 = vmatpush1.msra.mxu0 %v199
    %287 = vmatprep.subr.mxu0 %v198
    %288 = vmatpush1.msra.mxu0 %v197
    %289 = vmatprep.subr.mxu0 %v196
    %290 = vmatpush1.msra.mxu0 %v195
    %291 = vmatprep.subr.mxu0 %v194
    %292 = vmatpush1.msra.mxu0 %v193
    %293 = vmatprep.subr.mxu0 %v192
    %294 = vmatpush1.msra.mxu0 %v191
    %295 = vmatprep.subr.mxu0 %v190
    %296 = vmatpush1.msra.mxu0 %v189
    %297 = vmatprep.subr.mxu0 %v252
    %298 = vmatpush2.msra.mxu0 %v251
    %299 = vmatprep.subr.mxu0 %v250
    %300 = vmatpush2.msra.mxu0 %v249
    %301 = vmatprep.subr.mxu0 %v248
    %302 = vmatpush2.msra.mxu0 %v247
    %303 = vmatprep.subr.mxu0 %v246
    %304 = vmatpush2.msra.mxu0 %v245
    %305 = vmatprep.subr.mxu0 %v244
    %306 = vmatpush2.msra.mxu0 %v243
    %307 = vmatprep.subr.mxu0 %v242
    %308 = vmatpush2.msra.mxu0 %v241
    %309 = vmatprep.subr.mxu0 %v240
    %310 = vmatpush2.msra.mxu0 %v239
    %311 = vmatprep.subr.mxu0 %v238
    %312 = vmatpush2.msra.mxu0 %v237
    %313 = vmatprep.subr.mxu0 %v236
    %314 = vmatpush2.msra.mxu0 %v235
    %315 = vmatprep.subr.mxu0 %v234
    %316 = vmatpush2.msra.mxu0 %v233
    %317 = vmatprep.subr.mxu0 %v232
    %318 = vmatpush2.msra.mxu0 %v231
    %319 = vmatprep.subr.mxu0 %v230
    %320 = vmatpush2.msra.mxu0 %v229
    %321 = vmatprep.subr.mxu0 %v228
    %322 = vmatpush2.msra.mxu0 %v227
    %323 = vmatprep.subr.mxu0 %v226
    %324 = vmatpush2.msra.mxu0 %v225
    %325 = vmatprep.subr.mxu0 %v224
    %326 = vmatpush2.msra.mxu0 %v223
    %327 = vmatprep.subr.mxu0 %v222
    %328 = vmatpush2.msra.mxu0 %v221
    %329 = vmatprep.mubr.f32.mxu0 %v186
    %330 = vmatmul.mubr.f32.gmra.mxu0 %v185
    %v331 = vpop.f32.mrf.mxu0
    %v332 = vadd.f32 %v258, %v331
    %v333 = vpop.f32.mrf.mxu0
    %v334 = vadd.f32 %v262, %v333
    %335 = vmatprep.mubr.f32.mxu0 %v188
    %336 = vmatmul.mubr.f32.gmra.mxu0 %v187
    %v337 = vpop.f32.mrf.mxu0
    %v338 = vadd.f32 %v258, %v337
    %v339 = vpop.f32.mrf.mxu0
    %v340 = vadd.f32 %v262, %v339
    %341 = vdwg.mxu0
    %v342 = vmul.f32 %v334, 0.5
    %v343 = vmul.f32 %v340, 0.5
    %v344 = vtanh.pop %v342
    %v345 = vtanh.pop %v343
    %v346 = vmul.f32 %v344, 0.5
    %v347 = vmul.f32 %v345, 0.5
    %v348 = vadd.f32 %v346, 0.5
    %v349 = vadd.f32 %v347, 0.5
    %v350 = vmul.f32 %v332, %v348
    %v351 = vmul.f32 %v338, %v349
    %352 = vst [vmem:[#allocation8] sm:$0xff] %v350
    %353 = vst [vmem:[#allocation8 + $0x8] sm:$0xff] %v351
    // Predicated region
    $region34: #{tpu_custom_call.1} parent=1 // pred_check
      _
    $region35: #{tpu_custom_call.1} parent=1 // pred_check_branch
      %355 = sbr.rel (0) target = $region37
    $region36: #{tpu_custom_call.1} parent=1 // pred_region
      %s357 = ssub.s32 256, 256
      %358 = vsyncadd [#allocation4], %s357
      %s359 = sshll.u32 [#allocation8], 4
      %s360 = int_to_ptr.vmem [resolvable:$true] %s359
      %365 = dma.vmem_to_hbm [thread:$0]  %s360, 256, %s5, [#allocation4], 128, 128, 8
    $region37: #{tpu_custom_call.1} parent=1 // pred_fallthru
      _
    // Predicated region
    $region38: #{tpu_custom_call.1} parent=1 // pred_check
      _
    $region39: #{tpu_custom_call.1} parent=1 // pred_check_branch
      %367 = sbr.rel (0) target = $region41
    $region40: #{tpu_custom_call.1} parent=1 // pred_region
      %368 = dma.done [#allocation4], 256
    $region41: #{tpu_custom_call.1} parent=1 // pred_fallthru
      _
    %369 = vsyncpa [#allocation3], 1
    %370 = vsyncpa [#allocation6], 1
    %371 = vsyncpa [#allocation4], 1

</llo_original>
